<compile_context>
chip_gen: v6e
topology: v6e:2x2x1
jax: 0.10.0
libtpu: 0.0.40
codegen_flags: <defaults>
</compile_context>

<pallas_src>
import jax
import jax.numpy as jnp
from jax import lax
from jax.experimental import pallas as pl
from jax.experimental.pallas import tpu as pltpu

GAMMA = 0.2          # RocStar.__init__ sets gamma = 0.2
MAX_POS = 1000.0
MAX_NEG = 1000.0
_BIG = 1e30          # sentinel: forces a zero hinge for masked/padded elements
_LANE = 128          # lane chunk processed per inner-loop iteration
_UNROLL = 8          # bounded unroll of the chunk loop
_TILE_M_MAX = 16384  # epoch columns per grid step (soft cap)


def _round_up(x, m):
    return -(-x // m) * m


def _rocstar_kernel(sgn_ref, v_ref, cpos_ref, cneg_ref, out_ref, acc_ref):
    """Grid = (half, epoch_tile).  For the current epoch tile accumulate

        acc[i, l] += relu( (is_pos_i ? cpos_j : cneg_j) - v_i )^2

    elementwise into a lane-dense (N, 128) accumulator (j = chunk*128 + l).
    At the last tile of this half, lane-reduce once and emit per-row sums.
    Pos rows only ever see cpos (kept-neg epoch cols -> term m2); neg rows only
    ever see cneg (kept-pos epoch cols -> term m3); sentinel -BIG columns and
    +BIG padded rows contribute exactly 0.
    """
    k = pl.program_id(1)
    last = pl.num_programs(1) - 1

    @pl.when(k == 0)
    def _():
        acc_ref[...] = jnp.zeros_like(acc_ref)

    n = v_ref.shape[0]
    # Hoisted broadcasts (JAX does not CSE broadcast_in_dim -> keep out of loop).
    v_b = jnp.broadcast_to(v_ref[...], (n, _LANE))                    # (N, 128)
    is_pos_b = jnp.broadcast_to(sgn_ref[...], (n, _LANE)) > 0.0       # (N, 128)

    n_chunks = cpos_ref.shape[1] // _LANE                             # static

    def chunk(c, acc):
        off = pl.multiple_of(c * _LANE, _LANE)
        cp = cpos_ref[:, pl.ds(off, _LANE)]                           # (1, 128)
        cn = cneg_ref[:, pl.ds(off, _LANE)]                           # (1, 128)
        csel = jnp.where(is_pos_b, cp, cn)                            # (N, 128)
        h = jnp.maximum(csel - v_b, 0.0)
        return acc + h * h

    acc = lax.fori_loop(0, n_chunks, chunk, acc_ref[...], unroll=_UNROLL)
    acc_ref[...] = acc                                                # 1 writeback / step

    @pl.when(k == last)
    def _():
        # Single cross-lane (XLU) reduce per half; pos/neg split happens in wrapper.
        out_ref[...] = jnp.sum(acc, axis=1, keepdims=True).reshape(1, n, 1)


def _row_hinge_sums(sgn_p, v_p, cpos_p, cneg_p, *, n_pad, tile_m, n_half):
    """Per-row sums of the fused hinge^2 over the epoch buffer (2 halves)."""
    grid = (2, n_half)
    col_res = pl.BlockSpec((n_pad, 1), lambda p, k: (0, 0))            # resident
    row_tiled = pl.BlockSpec((1, tile_m), lambda p, k: (0, p * n_half + k))
    out_spec = pl.BlockSpec((1, n_pad, 1), lambda p, k: (p, 0, 0))     # per-half block

    out = pl.pallas_call(
        _rocstar_kernel,
        out_shape=jax.ShapeDtypeStruct((2, n_pad, 1), jnp.float32),
        grid_spec=pltpu.PrefetchScalarGridSpec(
            num_scalar_prefetch=0,
            grid=grid,
            in_specs=[col_res, col_res, row_tiled, row_tiled],
            out_specs=out_spec,
            scratch_shapes=[pltpu.VMEM((n_pad, _LANE), jnp.float32)]),
        compiler_params=pltpu.CompilerParams(
            dimension_semantics=("parallel", "arbitrary")),
    )(sgn_p, v_p, cpos_p, cneg_p)
    return jnp.sum(out[:, :, 0], axis=0)                               # (n_pad,)


@jax.jit
def rocstar_forward(_y_true, y_pred, _epoch_true, epoch_pred, key):
    """Exact semantics of RocStar.forward (boolean gathers -> sentinel masking)."""
    N = y_pred.shape[0]
    M = epoch_pred.shape[0]

    y_true = _y_true >= 0.5
    epoch_true = _epoch_true >= 0.5

    n_pos = jnp.sum(y_true.astype(jnp.int32))
    degenerate = (n_pos == 0) | (n_pos == N)

    # Random subsampling (torch.rand_like < max/cap).  NOTE: faithfully keeps
    # the reference bug where epoch_neg is also thresholded by cap_pos (and the
    # div-by-zero when the epoch buffer has no positives -> keep everything).
    cap_pos = jnp.sum(epoch_true.astype(jnp.float32))
    k1, k2 = jax.random.split(key)
    keep_pos = jax.random.uniform(k1, (M,)) < MAX_POS / cap_pos
    keep_neg = jax.random.uniform(k2, (M,)) < MAX_NEG / cap_pos

    epos = epoch_true & keep_pos
    eneg = (~epoch_true) & keep_neg

    ef = epoch_pred.astype(jnp.float32)
    yf = y_pred.astype(jnp.float32)

    # Fused-hinge operands (masks + gamma folded into sentinel values):
    #   pos row i, kept-neg col j: relu((e_j + g) - y_i)^2     -> c_pos, v = +y
    #   neg row i, kept-pos col j: relu((g - e_j) - (-y_i))^2  -> c_neg, v = -y
    c_pos = jnp.where(eneg, ef + GAMMA, -_BIG)
    c_neg = jnp.where(epos, GAMMA - ef, -_BIG)
    v = jnp.where(y_true, yf, -yf)
    sgn = jnp.where(y_true, 1.0, -1.0).astype(jnp.float32)

    # Padding: rows to a multiple of 8 (v = +BIG, sgn = 0 -> zero contribution);
    # epoch columns to 2 * n_half * tile_m with -BIG sentinels.  tile_m is a
    # multiple of UNROLL*LANE so the bounded unroll always divides evenly.
    n_pad = _round_up(N, 8)
    m1 = _round_up(M, _LANE)
    n_total = 2 * max(1, -(-m1 // (2 * _TILE_M_MAX)))     # even tile count
    tile_m = _round_up(-(-m1 // n_total), _UNROLL * _LANE)
    m_pad = n_total * tile_m
    n_half = n_total // 2

    v_p = jnp.pad(v, (0, n_pad - N), constant_values=_BIG).reshape(n_pad, 1)
    sgn_p = jnp.pad(sgn, (0, n_pad - N)).reshape(n_pad, 1)
    cpos_p = jnp.pad(c_pos, (0, m_pad - M), constant_values=-_BIG).reshape(1, m_pad)
    cneg_p = jnp.pad(c_neg, (0, m_pad - M), constant_values=-_BIG).reshape(1, m_pad)

    row = _row_hinge_sums(sgn_p, v_p, cpos_p, cneg_p,
                          n_pad=n_pad, tile_m=tile_m, n_half=n_half)

    sgn_flat = sgn_p[:, 0]
    sum_m2 = jnp.sum(jnp.maximum(sgn_flat, 0.0) * row)    # pos rows -> m2
    sum_m3 = jnp.sum(jnp.maximum(-sgn_flat, 0.0) * row)   # neg rows -> m3

    res2 = jnp.where(sum_m2 + sum_m3 != 0.0,
                     sum_m2 / MAX_POS + sum_m3 / MAX_NEG,
                     sum_m2 + sum_m3)
    res2 = jnp.where(jnp.isnan(res2), jnp.zeros_like(res2), res2)
    return jnp.where(degenerate, jnp.sum(y_pred) * 1e-08, res2)


def _reference(_y_true, y_pred, _epoch_true, epoch_pred, key):
    """Plain-JAX reference using the same subsample masks (validation)."""
    N = y_pred.shape[0]
    M = epoch_pred.shape[0]
    y_true = _y_true >= 0.5
    epoch_true = _epoch_true >= 0.5
    n_pos = jnp.sum(y_true.astype(jnp.int32))
    cap_pos = jnp.sum(epoch_true.astype(jnp.float32))
    k1, k2 = jax.random.split(key)
    keep_pos = jax.random.uniform(k1, (M,)) < MAX_POS / cap_pos
    keep_neg = jax.random.uniform(k2, (M,)) < MAX_NEG / cap_pos
    pos_m = y_true.astype(jnp.float32)[:, None]
    neg_m = (~y_true).astype(jnp.float32)[:, None]
    epos_m = (epoch_true & keep_pos).astype(jnp.float32)[None, :]
    eneg_m = ((~epoch_true) & keep_neg).astype(jnp.float32)[None, :]
    y = y_pred[:, None]
    e = epoch_pred[None, :]
    m2 = jnp.sum(pos_m * eneg_m * jnp.maximum(e - y + GAMMA, 0.0) ** 2)
    m3 = jnp.sum(neg_m * epos_m * jnp.maximum(y - e + GAMMA, 0.0) ** 2)
    res2 = jnp.where(m2 + m3 != 0.0, m2 / MAX_POS + m3 / MAX_NEG, 0.0)
    res2 = jnp.where(jnp.isnan(res2), 0.0, res2)
    return jnp.where((n_pos == 0) | (n_pos == N), jnp.sum(y_pred) * 1e-08, res2)


if __name__ == "__main__":
    key = jax.random.PRNGKey(0)
    k_lab, k_pred, k_elab, k_epred, k_sub = jax.random.split(key, 5)

    N = 117    # current batch size (non-multiple of 8 -> exercises row padding)
    M = 1000   # last-epoch buffer size (non-multiple of 128 -> column padding)

    y_true = (jax.random.uniform(k_lab, (N,)) > 0.5).astype(jnp.float32)
    y_pred = jax.random.uniform(k_pred, (N,), dtype=jnp.float32)
    epoch_true = (jax.random.uniform(k_elab, (M,)) > 0.5).astype(jnp.float32)
    epoch_pred = jax.random.uniform(k_epred, (M,), dtype=jnp.float32)

    loss = rocstar_forward(y_true, y_pred, epoch_true, epoch_pred, k_sub)
    loss = jax.block_until_ready(loss)

    ref = _reference(y_true, y_pred, epoch_true, epoch_pred, k_sub)
    # Tolerance covers f32 summation-order differences only (no bf16 anywhere).
    assert jnp.allclose(loss, ref, rtol=1e-3, atol=1e-6), (loss, ref)

    print("KERNEL_OK")
</pallas_src>

<mosaic_0001>
module attributes {stable_mosaic.version = 11 : i64} {
  func.func @_rocstar_kernel(%arg0: i32, %arg1: i32, %arg2: memref<120x1xf32, #tpu.memory_space<vmem>>, %arg3: memref<120x1xf32, #tpu.memory_space<vmem>>, %arg4: memref<1x1024xf32, #tpu.memory_space<vmem>>, %arg5: memref<1x1024xf32, #tpu.memory_space<vmem>>, %arg6: memref<1x120x1xf32, #tpu.memory_space<vmem>>, %arg7: memref<120x128xf32, #tpu.memory_space<vmem>>) attributes {dimension_semantics = [#tpu.dimension_semantics<parallel>, #tpu.dimension_semantics<arbitrary>], iteration_bounds = array<i64: 2, 1>, scalar_prefetch = 0 : i64, scratch_operands = 1 : i64, tpu.core_type = #tpu.core_type<tc>, window_params = [{pipeline_mode = #tpu.pipeline_mode<synchronous>, transform_indices = @transform_0, window_bounds = array<i64: 120, 1>}, {pipeline_mode = #tpu.pipeline_mode<synchronous>, transform_indices = @transform_1, window_bounds = array<i64: 120, 1>}, {transform_indices = @transform_2, window_bounds = array<i64: 1, 1024>}, {transform_indices = @transform_3, window_bounds = array<i64: 1, 1024>}, {transform_indices = @transform_4, window_bounds = array<i64: 1, 120, 1>}]} {
    %c0_i32 = arith.constant 0 : i32
    %0 = arith.cmpi eq, %arg1, %c0_i32 : i32
    %1 = arith.extui %0 : i1 to i32
    %c0_i32_0 = arith.constant 0 : i32
    %2 = arith.cmpi ne, %1, %c0_i32_0 : i32
    scf.if %2 {
      %cst_42 = arith.constant 0.000000e+00 : f32
      %144 = vector.broadcast %cst_42 : f32 to vector<120x128xf32>
      %c0_43 = arith.constant 0 : index
      %c0_44 = arith.constant 0 : index
      %145 = vector.load %arg7[%c0_43, %c0_44] : memref<120x128xf32, #tpu.memory_space<vmem>>, vector<120x128xf32>
      tpu.vector_store %arg7[%c0_43, %c0_44], %144 {strides = array<i32>} : memref<120x128xf32, #tpu.memory_space<vmem>>, vector<120x128xf32>,
    } else {
    }
    %c0 = arith.constant 0 : index
    %c0_1 = arith.constant 0 : index
    %3 = vector.load %arg3[%c0, %c0_1] : memref<120x1xf32, #tpu.memory_space<vmem>>, vector<120x1xf32>
    %4 = vector.shape_cast %3 : vector<120x1xf32> to vector<120x1xf32>
    %5 = vector.broadcast %4 : vector<120x1xf32> to vector<120x128xf32>
    %c0_2 = arith.constant 0 : index
    %c0_3 = arith.constant 0 : index
    %6 = vector.load %arg2[%c0_2, %c0_3] : memref<120x1xf32, #tpu.memory_space<vmem>>, vector<120x1xf32>
    %7 = vector.shape_cast %6 : vector<120x1xf32> to vector<120x1xf32>
    %8 = vector.broadcast %7 : vector<120x1xf32> to vector<120x128xf32>
    %cst = arith.constant 0.000000e+00 : f32
    %9 = vector.broadcast %cst : f32 to vector<120x128xf32>
    %10 = arith.cmpf ogt, %8, %9 : vector<120x128xf32>
    %c0_4 = arith.constant 0 : index
    %c0_5 = arith.constant 0 : index
    %11 = vector.load %arg7[%c0_4, %c0_5] : memref<120x128xf32, #tpu.memory_space<vmem>>, vector<120x128xf32>
    %c0_i32_6 = arith.constant 0 : i32
    %c128_i32 = arith.constant 128 : i32
    %12 = arith.muli %c0_i32_6, %c128_i32 : i32
    %13 = tpu.assume_multiple %12, 128 : i32
    %c0_7 = arith.constant 0 : index
    %14 = arith.index_cast %13 : i32 to index
    %15 = vector.load %arg4[%c0_7, %14] : memref<1x1024xf32, #tpu.memory_space<vmem>>, vector<1x128xf32>
    %c0_8 = arith.constant 0 : index
    %16 = arith.index_cast %13 : i32 to index
    %17 = vector.load %arg5[%c0_8, %16] : memref<1x1024xf32, #tpu.memory_space<vmem>>, vector<1x128xf32>
    %18 = vector.shape_cast %15 : vector<1x128xf32> to vector<1x128xf32>
    %19 = vector.broadcast %18 : vector<1x128xf32> to vector<120x128xf32>
    %20 = vector.shape_cast %17 : vector<1x128xf32> to vector<1x128xf32>
    %21 = vector.broadcast %20 : vector<1x128xf32> to vector<120x128xf32>
    %22 = arith.select %10, %19, %21 : vector<120x128xi1>, vector<120x128xf32>
    %23 = arith.subf %22, %5 : vector<120x128xf32>
    %cst_9 = arith.constant 0.000000e+00 : f32
    %24 = vector.broadcast %cst_9 : f32 to vector<120x128xf32>
    %25 = arith.maximumf %23, %24 : vector<120x128xf32>
    %26 = arith.mulf %25, %25 : vector<120x128xf32>
    %27 = arith.addf %11, %26 : vector<120x128xf32>
    %c1_i32 = arith.constant 1 : i32
    %c128_i32_10 = arith.constant 128 : i32
    %28 = arith.muli %c1_i32, %c128_i32_10 : i32
    %29 = tpu.assume_multiple %28, 128 : i32
    %c0_11 = arith.constant 0 : index
    %30 = arith.index_cast %29 : i32 to index
    %31 = vector.load %arg4[%c0_11, %30] : memref<1x1024xf32, #tpu.memory_space<vmem>>, vector<1x128xf32>
    %c0_12 = arith.constant 0 : index
    %32 = arith.index_cast %29 : i32 to index
    %33 = vector.load %arg5[%c0_12, %32] : memref<1x1024xf32, #tpu.memory_space<vmem>>, vector<1x128xf32>
    %34 = vector.shape_cast %31 : vector<1x128xf32> to vector<1x128xf32>
    %35 = vector.broadcast %34 : vector<1x128xf32> to vector<120x128xf32>
    %36 = vector.shape_cast %33 : vector<1x128xf32> to vector<1x128xf32>
    %37 = vector.broadcast %36 : vector<1x128xf32> to vector<120x128xf32>
    %38 = arith.select %10, %35, %37 : vector<120x128xi1>, vector<120x128xf32>
    %39 = arith.subf %38, %5 : vector<120x128xf32>
    %cst_13 = arith.constant 0.000000e+00 : f32
    %40 = vector.broadcast %cst_13 : f32 to vector<120x128xf32>
    %41 = arith.maximumf %39, %40 : vector<120x128xf32>
    %42 = arith.mulf %41, %41 : vector<120x128xf32>
    %43 = arith.addf %27, %42 : vector<120x128xf32>
    %c2_i32 = arith.constant 2 : i32
    %c128_i32_14 = arith.constant 128 : i32
    %44 = arith.muli %c2_i32, %c128_i32_14 : i32
    %45 = tpu.assume_multiple %44, 128 : i32
    %c0_15 = arith.constant 0 : index
    %46 = arith.index_cast %45 : i32 to index
    %47 = vector.load %arg4[%c0_15, %46] : memref<1x1024xf32, #tpu.memory_space<vmem>>, vector<1x128xf32>
    %c0_16 = arith.constant 0 : index
    %48 = arith.index_cast %45 : i32 to index
    %49 = vector.load %arg5[%c0_16, %48] : memref<1x1024xf32, #tpu.memory_space<vmem>>, vector<1x128xf32>
    %50 = vector.shape_cast %47 : vector<1x128xf32> to vector<1x128xf32>
    %51 = vector.broadcast %50 : vector<1x128xf32> to vector<120x128xf32>
    %52 = vector.shape_cast %49 : vector<1x128xf32> to vector<1x128xf32>
    %53 = vector.broadcast %52 : vector<1x128xf32> to vector<120x128xf32>
    %54 = arith.select %10, %51, %53 : vector<120x128xi1>, vector<120x128xf32>
    %55 = arith.subf %54, %5 : vector<120x128xf32>
    %cst_17 = arith.constant 0.000000e+00 : f32
    %56 = vector.broadcast %cst_17 : f32 to vector<120x128xf32>
    %57 = arith.maximumf %55, %56 : vector<120x128xf32>
    %58 = arith.mulf %57, %57 : vector<120x128xf32>
    %59 = arith.addf %43, %58 : vector<120x128xf32>
    %c3_i32 = arith.constant 3 : i32
    %c128_i32_18 = arith.constant 128 : i32
    %60 = arith.muli %c3_i32, %c128_i32_18 : i32
    %61 = tpu.assume_multiple %60, 128 : i32
    %c0_19 = arith.constant 0 : index
    %62 = arith.index_cast %61 : i32 to index
    %63 = vector.load %arg4[%c0_19, %62] : memref<1x1024xf32, #tpu.memory_space<vmem>>, vector<1x128xf32>
    %c0_20 = arith.constant 0 : index
    %64 = arith.index_cast %61 : i32 to index
    %65 = vector.load %arg5[%c0_20, %64] : memref<1x1024xf32, #tpu.memory_space<vmem>>, vector<1x128xf32>
    %66 = vector.shape_cast %63 : vector<1x128xf32> to vector<1x128xf32>
    %67 = vector.broadcast %66 : vector<1x128xf32> to vector<120x128xf32>
    %68 = vector.shape_cast %65 : vector<1x128xf32> to vector<1x128xf32>
    %69 = vector.broadcast %68 : vector<1x128xf32> to vector<120x128xf32>
    %70 = arith.select %10, %67, %69 : vector<120x128xi1>, vector<120x128xf32>
    %71 = arith.subf %70, %5 : vector<120x128xf32>
    %cst_21 = arith.constant 0.000000e+00 : f32
    %72 = vector.broadcast %cst_21 : f32 to vector<120x128xf32>
    %73 = arith.maximumf %71, %72 : vector<120x128xf32>
    %74 = arith.mulf %73, %73 : vector<120x128xf32>
    %75 = arith.addf %59, %74 : vector<120x128xf32>
    %c4_i32 = arith.constant 4 : i32
    %c128_i32_22 = arith.constant 128 : i32
    %76 = arith.muli %c4_i32, %c128_i32_22 : i32
    %77 = tpu.assume_multiple %76, 128 : i32
    %c0_23 = arith.constant 0 : index
    %78 = arith.index_cast %77 : i32 to index
    %79 = vector.load %arg4[%c0_23, %78] : memref<1x1024xf32, #tpu.memory_space<vmem>>, vector<1x128xf32>
    %c0_24 = arith.constant 0 : index
    %80 = arith.index_cast %77 : i32 to index
    %81 = vector.load %arg5[%c0_24, %80] : memref<1x1024xf32, #tpu.memory_space<vmem>>, vector<1x128xf32>
    %82 = vector.shape_cast %79 : vector<1x128xf32> to vector<1x128xf32>
    %83 = vector.broadcast %82 : vector<1x128xf32> to vector<120x128xf32>
    %84 = vector.shape_cast %81 : vector<1x128xf32> to vector<1x128xf32>
    %85 = vector.broadcast %84 : vector<1x128xf32> to vector<120x128xf32>
    %86 = arith.select %10, %83, %85 : vector<120x128xi1>, vector<120x128xf32>
    %87 = arith.subf %86, %5 : vector<120x128xf32>
    %cst_25 = arith.constant 0.000000e+00 : f32
    %88 = vector.broadcast %cst_25 : f32 to vector<120x128xf32>
    %89 = arith.maximumf %87, %88 : vector<120x128xf32>
    %90 = arith.mulf %89, %89 : vector<120x128xf32>
    %91 = arith.addf %75, %90 : vector<120x128xf32>
    %c5_i32 = arith.constant 5 : i32
    %c128_i32_26 = arith.constant 128 : i32
    %92 = arith.muli %c5_i32, %c128_i32_26 : i32
    %93 = tpu.assume_multiple %92, 128 : i32
    %c0_27 = arith.constant 0 : index
    %94 = arith.index_cast %93 : i32 to index
    %95 = vector.load %arg4[%c0_27, %94] : memref<1x1024xf32, #tpu.memory_space<vmem>>, vector<1x128xf32>
    %c0_28 = arith.constant 0 : index
    %96 = arith.index_cast %93 : i32 to index
    %97 = vector.load %arg5[%c0_28, %96] : memref<1x1024xf32, #tpu.memory_space<vmem>>, vector<1x128xf32>
    %98 = vector.shape_cast %95 : vector<1x128xf32> to vector<1x128xf32>
    %99 = vector.broadcast %98 : vector<1x128xf32> to vector<120x128xf32>
    %100 = vector.shape_cast %97 : vector<1x128xf32> to vector<1x128xf32>
    %101 = vector.broadcast %100 : vector<1x128xf32> to vector<120x128xf32>
    %102 = arith.select %10, %99, %101 : vector<120x128xi1>, vector<120x128xf32>
    %103 = arith.subf %102, %5 : vector<120x128xf32>
    %cst_29 = arith.constant 0.000000e+00 : f32
    %104 = vector.broadcast %cst_29 : f32 to vector<120x128xf32>
    %105 = arith.maximumf %103, %104 : vector<120x128xf32>
    %106 = arith.mulf %105, %105 : vector<120x128xf32>
    %107 = arith.addf %91, %106 : vector<120x128xf32>
    %c6_i32 = arith.constant 6 : i32
    %c128_i32_30 = arith.constant 128 : i32
    %108 = arith.muli %c6_i32, %c128_i32_30 : i32
    %109 = tpu.assume_multiple %108, 128 : i32
    %c0_31 = arith.constant 0 : index
    %110 = arith.index_cast %109 : i32 to index
    %111 = vector.load %arg4[%c0_31, %110] : memref<1x1024xf32, #tpu.memory_space<vmem>>, vector<1x128xf32>
    %c0_32 = arith.constant 0 : index
    %112 = arith.index_cast %109 : i32 to index
    %113 = vector.load %arg5[%c0_32, %112] : memref<1x1024xf32, #tpu.memory_space<vmem>>, vector<1x128xf32>
    %114 = vector.shape_cast %111 : vector<1x128xf32> to vector<1x128xf32>
    %115 = vector.broadcast %114 : vector<1x128xf32> to vector<120x128xf32>
    %116 = vector.shape_cast %113 : vector<1x128xf32> to vector<1x128xf32>
    %117 = vector.broadcast %116 : vector<1x128xf32> to vector<120x128xf32>
    %118 = arith.select %10, %115, %117 : vector<120x128xi1>, vector<120x128xf32>
    %119 = arith.subf %118, %5 : vector<120x128xf32>
    %cst_33 = arith.constant 0.000000e+00 : f32
    %120 = vector.broadcast %cst_33 : f32 to vector<120x128xf32>
    %121 = arith.maximumf %119, %120 : vector<120x128xf32>
    %122 = arith.mulf %121, %121 : vector<120x128xf32>
    %123 = arith.addf %107, %122 : vector<120x128xf32>
    %c7_i32 = arith.constant 7 : i32
    %c128_i32_34 = arith.constant 128 : i32
    %124 = arith.muli %c7_i32, %c128_i32_34 : i32
    %125 = tpu.assume_multiple %124, 128 : i32
    %c0_35 = arith.constant 0 : index
    %126 = arith.index_cast %125 : i32 to index
    %127 = vector.load %arg4[%c0_35, %126] : memref<1x1024xf32, #tpu.memory_space<vmem>>, vector<1x128xf32>
    %c0_36 = arith.constant 0 : index
    %128 = arith.index_cast %125 : i32 to index
    %129 = vector.load %arg5[%c0_36, %128] : memref<1x1024xf32, #tpu.memory_space<vmem>>, vector<1x128xf32>
    %130 = vector.shape_cast %127 : vector<1x128xf32> to vector<1x128xf32>
    %131 = vector.broadcast %130 : vector<1x128xf32> to vector<120x128xf32>
    %132 = vector.shape_cast %129 : vector<1x128xf32> to vector<1x128xf32>
    %133 = vector.broadcast %132 : vector<1x128xf32> to vector<120x128xf32>
    %134 = arith.select %10, %131, %133 : vector<120x128xi1>, vector<120x128xf32>
    %135 = arith.subf %134, %5 : vector<120x128xf32>
    %cst_37 = arith.constant 0.000000e+00 : f32
    %136 = vector.broadcast %cst_37 : f32 to vector<120x128xf32>
    %137 = arith.maximumf %135, %136 : vector<120x128xf32>
    %138 = arith.mulf %137, %137 : vector<120x128xf32>
    %139 = arith.addf %123, %138 : vector<120x128xf32>
    %c8_i32 = arith.constant 8 : i32
    %c0_38 = arith.constant 0 : index
    %c0_39 = arith.constant 0 : index
    %140 = vector.load %arg7[%c0_38, %c0_39] : memref<120x128xf32, #tpu.memory_space<vmem>>, vector<120x128xf32>
    tpu.vector_store %arg7[%c0_38, %c0_39], %139 {strides = array<i32>} : memref<120x128xf32, #tpu.memory_space<vmem>>, vector<120x128xf32>,
    %c0_i32_40 = arith.constant 0 : i32
    %141 = arith.cmpi eq, %arg1, %c0_i32_40 : i32
    %142 = arith.extui %141 : i1 to i32
    %c0_i32_41 = arith.constant 0 : i32
    %143 = arith.cmpi ne, %142, %c0_i32_41 : i32
    scf.if %143 {
      %cst_42 = arith.constant dense<0.000000e+00> : vector<120xf32>
      %144 = vector.multi_reduction <add>, %139, %cst_42 [1] : vector<120x128xf32> to vector<120xf32>
      %145 = vector.shape_cast %144 : vector<120xf32> to vector<120x1xf32>
      %146 = vector.shape_cast %145 : vector<120x1xf32> to vector<1x120x1xf32>
      %c0_43 = arith.constant 0 : index
      %c0_44 = arith.constant 0 : index
      %c0_45 = arith.constant 0 : index
      %147 = vector.load %arg6[%c0_43, %c0_44, %c0_45] : memref<1x120x1xf32, #tpu.memory_space<vmem>>, vector<1x120x1xf32>
      tpu.vector_store %arg6[%c0_43, %c0_44, %c0_45], %146 {strides = array<i32>} : memref<1x120x1xf32, #tpu.memory_space<vmem>>, vector<1x120x1xf32>,
    } else {
    }
    return
  }
  func.func @transform_0(%arg0: i32, %arg1: i32) -> (i32, i32) {
    %c0_i32 = arith.constant 0 : i32
    %c0_i32_0 = arith.constant 0 : i32
    %c0_i32_1 = arith.constant 0 : i32
    return %c0_i32, %c0_i32_0 : i32, i32
  }
  func.func @transform_1(%arg0: i32, %arg1: i32) -> (i32, i32) {
    %c0_i32 = arith.constant 0 : i32
    %c0_i32_0 = arith.constant 0 : i32
    %c0_i32_1 = arith.constant 0 : i32
    return %c0_i32, %c0_i32_0 : i32, i32
  }
  func.func @transform_2(%arg0: i32, %arg1: i32) -> (i32, i32) {
    %c1_i32 = arith.constant 1 : i32
    %0 = arith.muli %arg0, %c1_i32 : i32
    %1 = arith.addi %0, %arg1 : i32
    %c0_i32 = arith.constant 0 : i32
    %c0_i32_0 = arith.constant 0 : i32
    return %c0_i32, %1 : i32, i32
  }
  func.func @transform_3(%arg0: i32, %arg1: i32) -> (i32, i32) {
    %c1_i32 = arith.constant 1 : i32
    %0 = arith.muli %arg0, %c1_i32 : i32
    %1 = arith.addi %0, %arg1 : i32
    %c0_i32 = arith.constant 0 : i32
    %c0_i32_0 = arith.constant 0 : i32
    return %c0_i32, %1 : i32, i32
  }
  func.func @transform_4(%arg0: i32, %arg1: i32) -> (i32, i32, i32) {
    %c0_i32 = arith.constant 0 : i32
    %c0_i32_0 = arith.constant 0 : i32
    %c0_i32_1 = arith.constant 0 : i32
    return %arg0, %c0_i32, %c0_i32_0 : i32, i32, i32
  }
}

</mosaic_0001>

<llo_original>
// kernel: rocstar_forward.3
$region0: #{rocstar_forward.3}
  #allocation0 [shape = 'u32[]', space=smem, size = 0x4, offset = 0x4, fixed_abs, tag = 'smem constant byte address 0x4 - core index']
  #allocation1 [shape = 'u32[144,128]{1,0:T(1,128)}', space=vmem, size = 0x12000, scoped, tag = 'internal scratch']
  #allocation2 [shape = 'f32[120,128]{1,0:T(8,128)}', space=vmem, size = 0xf000, scoped, tag = 'scratch operand']
  %s0 = inlined_call_operand.vmem [shape: f32[120,1], index: 0, kind: input, shape index: {}]
  %s1 = inlined_call_operand.vmem [shape: f32[120,1], index: 1, kind: input, shape index: {}]
  %s2 = inlined_call_operand.vmem [shape: f32[1,2048], index: 2, kind: input, shape index: {}]
  %s3 = inlined_call_operand.vmem [shape: f32[1,2048], index: 3, kind: input, shape index: {}]
  %s4 = inlined_call_operand.vmem [shape: f32[2,120,1], index: 4, kind: output, shape index: {}]
  %s5 = sld [smem:[#allocation0]]
  $region57: #{rocstar_forward.3} parent=0
    _
  %s7 = ssub.s32 1, %s5
  %s8 = scalar_select 0, %s7, %s5
  loop: start=0, step=1, limit=4
  $region2: #{rocstar_forward.3} parent=0 // loop_pre_header
    _
  $region3: #{rocstar_forward.3} parent=0 // loop_header
    %s10 = sphi 0, %s14
    %p11 = scmp.ge.s32.totalorder %s10, 4
    %s17 = sphi 0, %s29
    %s18 = sphi 0, %s25
    %s19 = sphi 0, %s17
    %s20 = sphi 0, %s18
    %s21 = sphi 0, %s19
    %s22 = sphi 0, %s20
    %s30 = sphi 0, %s30
    %s32 = sphi 0, %s30
    %s33 = sphi 0, %s32
    %s47 = sphi 0, %s33
    %s51 = sphi 0, %s51
    %s53 = sphi 0, %s51
    %s54 = sphi 0, %s53
    %s68 = sphi 0, %s54
    %s76 = sphi 0, %s78
    %s79 = sphi 0, %s76
    %s80 = sphi 0, %s79
    %s96 = sphi 0, %s80
    %s104 = sphi 0, %s106
    %s107 = sphi 0, %s104
    %s108 = sphi 0, %s107
    %s124 = sphi 0, %s108
    %s130 = sphi 0, %s132
    %s133 = sphi 0, %s130
    %s134 = sphi 0, %s133
    %s150 = sphi 0, %s134
  $region4: #{rocstar_forward.3} parent=0 // loop_header_branch
    %13 = sbr.rel (%p11) target = $region8
  $region5: #{rocstar_forward.3} parent=0 // loop_body
    %s15 = ssub.s32 %s10, 1
    %s16 = ssub.s32 %s10, 2
    %s23 = sadd.s32 1, %s18
    %p24 = scmp.ge.s32.totalorder %s23, 1
    %s25 = scalar_select %p24, 0, %s23
    %s26 = sadd.s32 1, %s17
    %s27 = scalar_select %p24, %s26, %s17
    %p28 = scmp.ge.s32.totalorder %s27, 2
    %s29 = scalar_select %p28, 0, %s27
    %s31 = sadd.s32 %s30, 1
    %p34 = scmp.eq.s32.totalorder %s10, 1
    %p35 = scmp.ne.s32.totalorder %s30, %s32
    %p36 = scmp.eq.s32.totalorder %s10, 0
    %p37 = por %p35, %p36
    %p38 = scmp.ne.s32.totalorder %s30, %s32
    %p39 = scmp.eq.s32.totalorder %s15, 1
    %p40 = por %p38, %p39
    %p41 = scmp.ne.s32.totalorder %s32, %s33
    %p42 = scmp.eq.s32.totalorder %s15, 0
    %p43 = por %p41, %p42
    %p44 = scmp.ne.s32.totalorder %s32, %s33
    %p45 = scmp.eq.s32.totalorder %s16, 1
    %p46 = por %p44, %p45
    %p48 = scmp.ne.s32.totalorder %s33, %s47
    %p49 = scmp.eq.s32.totalorder %s16, 0
    %p50 = por %p48, %p49
    %s52 = sadd.s32 %s51, 1
    %p55 = scmp.eq.s32.totalorder %s10, 1
    %p56 = scmp.ne.s32.totalorder %s51, %s53
    %p57 = scmp.eq.s32.totalorder %s10, 0
    %p58 = por %p56, %p57
    %p59 = scmp.ne.s32.totalorder %s51, %s53
    %p60 = scmp.eq.s32.totalorder %s15, 1
    %p61 = por %p59, %p60
    %p62 = scmp.ne.s32.totalorder %s53, %s54
    %p63 = scmp.eq.s32.totalorder %s15, 0
    %p64 = por %p62, %p63
    %p65 = scmp.ne.s32.totalorder %s53, %s54
    %p66 = scmp.eq.s32.totalorder %s16, 1
    %p67 = por %p65, %p66
    %p69 = scmp.ne.s32.totalorder %s54, %s68
    %p70 = scmp.eq.s32.totalorder %s16, 0
    %p71 = por %p69, %p70
    %s72 = sadd.s32 %s17, %s18
    %s73 = sadd.s32 %s29, %s25
    %s74 = ssub.s32 %s72, %s73
    %p75 = scmp.eq.s32.totalorder %s74, 0
    %s77 = sadd.s32 %s76, 1
    %s78 = scalar_select %p75, %s76, %s77
    %p81 = pneg %p75
    %p82 = scmp.eq.s32.totalorder %s10, 1
    %p83 = por %p81, %p82
    %p84 = scmp.ne.s32.totalorder %s76, %s79
    %p85 = scmp.eq.s32.totalorder %s10, 0
    %p86 = por %p84, %p85
    %p87 = scmp.ne.s32.totalorder %s76, %s79
    %p88 = scmp.eq.s32.totalorder %s15, 1
    %p89 = por %p87, %p88
    %p90 = scmp.ne.s32.totalorder %s79, %s80
    %p91 = scmp.eq.s32.totalorder %s15, 0
    %p92 = por %p90, %p91
    %p93 = scmp.ne.s32.totalorder %s79, %s80
    %p94 = scmp.eq.s32.totalorder %s16, 1
    %p95 = por %p93, %p94
    %p97 = scmp.ne.s32.totalorder %s80, %s96
    %p98 = scmp.eq.s32.totalorder %s16, 0
    %p99 = por %p97, %p98
    %s100 = sadd.s32 %s17, %s18
    %s101 = sadd.s32 %s29, %s25
    %s102 = ssub.s32 %s100, %s101
    %p103 = scmp.eq.s32.totalorder %s102, 0
    %s105 = sadd.s32 %s104, 1
    %s106 = scalar_select %p103, %s104, %s105
    %p109 = pneg %p103
    %p110 = scmp.eq.s32.totalorder %s10, 1
    %p111 = por %p109, %p110
    %p112 = scmp.ne.s32.totalorder %s104, %s107
    %p113 = scmp.eq.s32.totalorder %s10, 0
    %p114 = por %p112, %p113
    %p115 = scmp.ne.s32.totalorder %s104, %s107
    %p116 = scmp.eq.s32.totalorder %s15, 1
    %p117 = por %p115, %p116
    %p118 = scmp.ne.s32.totalorder %s107, %s108
    %p119 = scmp.eq.s32.totalorder %s15, 0
    %p120 = por %p118, %p119
    %p121 = scmp.ne.s32.totalorder %s107, %s108
    %p122 = scmp.eq.s32.totalorder %s16, 1
    %p123 = por %p121, %p122
    %p125 = scmp.ne.s32.totalorder %s108, %s124
    %p126 = scmp.eq.s32.totalorder %s16, 0
    %p127 = por %p125, %p126
    %s128 = ssub.s32 %s17, %s29
    %p129 = scmp.eq.s32.totalorder %s128, 0
    %s131 = sadd.s32 %s130, 1
    %s132 = scalar_select %p129, %s130, %s131
    %p135 = pneg %p129
    %p136 = scmp.eq.s32.totalorder %s10, 1
    %p137 = por %p135, %p136
    %p138 = scmp.ne.s32.totalorder %s130, %s133
    %p139 = scmp.eq.s32.totalorder %s10, 0
    %p140 = por %p138, %p139
    %p141 = scmp.ne.s32.totalorder %s130, %s133
    %p142 = scmp.eq.s32.totalorder %s15, 1
    %p143 = por %p141, %p142
    %p144 = scmp.ne.s32.totalorder %s133, %s134
    %p145 = scmp.eq.s32.totalorder %s15, 0
    %p146 = por %p144, %p145
    %p147 = scmp.ne.s32.totalorder %s133, %s134
    %p148 = scmp.eq.s32.totalorder %s16, 1
    %p149 = por %p147, %p148
    %p151 = scmp.ne.s32.totalorder %s134, %s150
    %p152 = scmp.eq.s32.totalorder %s16, 0
    %p153 = por %p151, %p152
    %p154 = scmp.le.s32.totalorder 1, %s10
    %p155 = scmp.lt.s32.totalorder %s10, 3
    %p156 = pnand %p154, %p155
    %p157 = pneg %p156
    // Predicated region
    $region9: #{rocstar_forward.3} parent=5 // pred_check
      _
    $region10: #{rocstar_forward.3} parent=5 // pred_check_branch
      %159 = sbr.rel (%p156) target = $region12
    $region11: #{rocstar_forward.3} parent=5 // pred_region
      %s160 = ssub.s32 %s10, 1
      // Predicated region
      $region13: #{rocstar_forward.3} parent=11 // pred_check
        %p161 = pneg %p43
      $region14: #{rocstar_forward.3} parent=11 // pred_check_branch
        %163 = sbr.rel (%p161) target = $region16
      $region15: #{rocstar_forward.3} parent=11 // pred_region
        _
      $region16: #{rocstar_forward.3} parent=11 // pred_fallthru
        _
      // Predicated region
      $region17: #{rocstar_forward.3} parent=11 // pred_check
        %p164 = pneg %p64
      $region18: #{rocstar_forward.3} parent=11 // pred_check_branch
        %166 = sbr.rel (%p164) target = $region20
      $region19: #{rocstar_forward.3} parent=11 // pred_region
        _
      $region20: #{rocstar_forward.3} parent=11 // pred_fallthru
        _
    $region12: #{rocstar_forward.3} parent=5 // pred_fallthru
      _
    %p167 = scmp.lt.s32.totalorder %s10, 2
    // Predicated region
    $region21: #{rocstar_forward.3} parent=5 // pred_check
      %p168 = pneg %p167
    $region22: #{rocstar_forward.3} parent=5 // pred_check_branch
      %170 = sbr.rel (%p168) target = $region24
    $region23: #{rocstar_forward.3} parent=5 // pred_region
      // Predicated region
      $region25: #{rocstar_forward.3} parent=23 // pred_check
        %p171 = pneg %p86
      $region26: #{rocstar_forward.3} parent=23 // pred_check_branch
        %173 = sbr.rel (%p171) target = $region28
      $region27: #{rocstar_forward.3} parent=23 // pred_region
        %s174 = sadd.s32 %s17, %s18
        %s175 = smul.u32 8, %s174
        %p176 = scmp.lt.s32.totalorder %s175, 15
        %s177 = scalar_select %p176, %s175, 15
        %s178 = scalar_lea.vmem %s2, %s177
        %s179 = sadd.s32 %s17, %s18
        %s180 = smul.u32 8, %s179
      $region28: #{rocstar_forward.3} parent=23 // pred_fallthru
        _
      // Predicated region
      $region29: #{rocstar_forward.3} parent=23 // pred_check
        %p181 = pneg %p114
      $region30: #{rocstar_forward.3} parent=23 // pred_check_branch
        %183 = sbr.rel (%p181) target = $region32
      $region31: #{rocstar_forward.3} parent=23 // pred_region
        %s184 = sadd.s32 %s17, %s18
        %s185 = smul.u32 8, %s184
        %p186 = scmp.lt.s32.totalorder %s185, 15
        %s187 = scalar_select %p186, %s185, 15
        %s188 = scalar_lea.vmem %s3, %s187
        %s189 = sadd.s32 %s17, %s18
        %s190 = smul.u32 8, %s189
      $region32: #{rocstar_forward.3} parent=23 // pred_fallthru
        _
    $region24: #{rocstar_forward.3} parent=5 // pred_fallthru
      _
    %p191 = scmp.le.s32.totalorder 1, %s10
    %p192 = scmp.lt.s32.totalorder %s10, 3
    %p193 = pnand %p191, %p192
    %p194 = pneg %p193
    // Predicated region
    $region33: #{rocstar_forward.3} parent=5 // pred_check
      _
    $region34: #{rocstar_forward.3} parent=5 // pred_check_branch
      %196 = sbr.rel (%p193) target = $region36
    $region35: #{rocstar_forward.3} parent=5 // pred_region
      %s197 = ssub.s32 %s10, 1
      %p198 = pneg %p43
      %p199 = pneg %p40
      %p200 = pneg %p64
      %p201 = pneg %p61
      %s202 = sadd.s32 %s19, %s20
      %s203 = smul.u32 8, %s202
      %p204 = scmp.lt.s32.totalorder %s203, 15
      %s205 = scalar_select %p204, %s203, 15
      %s206 = scalar_lea.vmem %s2, %s205
      %p207 = pneg %p92
      %p208 = pneg %p89
      %s209 = sadd.s32 %s19, %s20
      %s210 = smul.u32 8, %s209
      %p211 = scmp.lt.s32.totalorder %s210, 15
      %s212 = scalar_select %p211, %s210, 15
      %s213 = scalar_lea.vmem %s3, %s212
      %p214 = pneg %p120
      %p215 = pneg %p117
      %p216 = pneg %p146
      %p217 = pneg %p143
      %p218 = scmp.lt.s32.totalorder %s19, 1
      %s219 = scalar_select %p218, %s19, 1
      %s220 = smul.addr %s219, 15
      %s221 = smul.addr %s220, 8
      %s222 = scalar_lea.vmem %s4, %s221
      %s223 = sadd.s32 %s19, %s20
      %s224 = smul.u32 8, %s223
      %p225 = scmp.lt.s32.totalorder %s224, 15
      %s226 = scalar_select %p225, %s224, 15
      %s227 = scalar_lea.vmem %s2, %s226
      %s228 = sadd.s32 %s19, %s20
      %s229 = smul.u32 8, %s228
      %s230 = sadd.s32 %s19, %s20
      %s231 = smul.u32 8, %s230
      %p232 = scmp.lt.s32.totalorder %s231, 15
      %s233 = scalar_select %p232, %s231, 15
      %s234 = scalar_lea.vmem %s3, %s233
      %s235 = sadd.s32 %s19, %s20
      %s236 = smul.u32 8, %s235
      %p237 = scmp.lt.s32.totalorder %s19, 1
      %s238 = scalar_select %p237, %s19, 1
      %s239 = smul.addr %s238, 15
      %s240 = smul.addr %s239, 8
      %s241 = scalar_lea.vmem %s4, %s240
      %p242 = scmp.eq.s32.totalorder %s20, 0
      // Predicated region
      $region37: #{rocstar_forward.3} parent=35 // pred_check
        %p243 = pneg %p242
      $region38: #{rocstar_forward.3} parent=35 // pred_check_branch
        %245 = sbr.rel (%p243) target = $region40
      $region39: #{rocstar_forward.3} parent=35 // pred_region
        %246 = vst [vmem:[#allocation2] sm:$0xff] 0.0
        %247 = vst [vmem:[#allocation2 + $0x8] sm:$0xff] 0.0
        %248 = vst [vmem:[#allocation2 + $0x10] sm:$0xff] 0.0
        %249 = vst [vmem:[#allocation2 + $0x18] sm:$0xff] 0.0
        %250 = vst [vmem:[#allocation2 + $0x20] sm:$0xff] 0.0
        %251 = vst [vmem:[#allocation2 + $0x28] sm:$0xff] 0.0
        %252 = vst [vmem:[#allocation2 + $0x30] sm:$0xff] 0.0
        %253 = vst [vmem:[#allocation2 + $0x38] sm:$0xff] 0.0
        %254 = vst [vmem:[#allocation2 + $0x40] sm:$0xff] 0.0
        %255 = vst [vmem:[#allocation2 + $0x48] sm:$0xff] 0.0
        %256 = vst [vmem:[#allocation2 + $0x50] sm:$0xff] 0.0
        %257 = vst [vmem:[#allocation2 + $0x58] sm:$0xff] 0.0
        %258 = vst [vmem:[#allocation2 + $0x60] sm:$0xff] 0.0
        %259 = vst [vmem:[#allocation2 + $0x68] sm:$0xff] 0.0
        %260 = vst [vmem:[#allocation2 + $0x70] sm:$0xff] 0.0
      $region40: #{rocstar_forward.3} parent=35 // pred_fallthru
        _
      %v261 = vld [vmem:[%s1] sm:$0xff]
      %v262 = vld [vmem:[%s1 + $0x8] sm:$0xff]
      %v263 = vld [vmem:[%s1 + $0x10] sm:$0xff]
      %v264 = vld [vmem:[%s1 + $0x18] sm:$0xff]
      %v265 = vld [vmem:[%s1 + $0x20] sm:$0xff]
      %v266 = vld [vmem:[%s1 + $0x28] sm:$0xff]
      %v267 = vld [vmem:[%s1 + $0x30] sm:$0xff]
      %v268 = vld [vmem:[%s1 + $0x38] sm:$0xff]
      %v269 = vld [vmem:[%s1 + $0x40] sm:$0xff]
      %v270 = vld [vmem:[%s1 + $0x48] sm:$0xff]
      %v271 = vld [vmem:[%s1 + $0x50] sm:$0xff]
      %v272 = vld [vmem:[%s1 + $0x58] sm:$0xff]
      %v273 = vld [vmem:[%s1 + $0x60] sm:$0xff]
      %v274 = vld [vmem:[%s1 + $0x68] sm:$0xff]
      %v275 = vld [vmem:[%s1 + $0x70] sm:$0xff]
      %277 = vset.pattern.permute.xlu0 0
      %278 = vperm.xlu0 %277, %v261
      %v279 = vpop.permute.xlu0 %278
      %282 = vset.pattern.permute.xlu0 0
      %283 = vperm.xlu0 %282, %v262
      %v284 = vpop.permute.xlu0 %283
      %287 = vset.pattern.permute.xlu0 0
      %288 = vperm.xlu0 %287, %v263
      %v289 = vpop.permute.xlu0 %288
      %292 = vset.pattern.permute.xlu0 0
      %293 = vperm.xlu0 %292, %v264
      %v294 = vpop.permute.xlu0 %293
      %297 = vset.pattern.permute.xlu0 0
      %298 = vperm.xlu0 %297, %v265
      %v299 = vpop.permute.xlu0 %298
      %302 = vset.pattern.permute.xlu0 0
      %303 = vperm.xlu0 %302, %v266
      %v304 = vpop.permute.xlu0 %303
      %307 = vset.pattern.permute.xlu0 0
      %308 = vperm.xlu0 %307, %v267
      %v309 = vpop.permute.xlu0 %308
      %312 = vset.pattern.permute.xlu0 0
      %313 = vperm.xlu0 %312, %v268
      %v314 = vpop.permute.xlu0 %313
      %317 = vset.pattern.permute.xlu0 0
      %318 = vperm.xlu0 %317, %v269
      %v319 = vpop.permute.xlu0 %318
      %322 = vset.pattern.permute.xlu0 0
      %323 = vperm.xlu0 %322, %v270
      %v324 = vpop.permute.xlu0 %323
      %327 = vset.pattern.permute.xlu0 0
      %328 = vperm.xlu0 %327, %v271
      %v329 = vpop.permute.xlu0 %328
      %332 = vset.pattern.permute.xlu0 0
      %333 = vperm.xlu0 %332, %v272
      %v334 = vpop.permute.xlu0 %333
      %337 = vset.pattern.permute.xlu0 0
      %338 = vperm.xlu0 %337, %v273
      %v339 = vpop.permute.xlu0 %338
      %342 = vset.pattern.permute.xlu0 0
      %343 = vperm.xlu0 %342, %v274
      %v344 = vpop.permute.xlu0 %343
      %347 = vset.pattern.permute.xlu0 0
      %348 = vperm.xlu0 %347, %v275
      %v349 = vpop.permute.xlu0 %348
      %v351 = vld [vmem:[%s0] sm:$0xff]
      %v352 = vld [vmem:[%s0 + $0x8] sm:$0xff]
      %v353 = vld [vmem:[%s0 + $0x10] sm:$0xff]
      %v354 = vld [vmem:[%s0 + $0x18] sm:$0xff]
      %v355 = vld [vmem:[%s0 + $0x20] sm:$0xff]
      %v356 = vld [vmem:[%s0 + $0x28] sm:$0xff]
      %v357 = vld [vmem:[%s0 + $0x30] sm:$0xff]
      %v358 = vld [vmem:[%s0 + $0x38] sm:$0xff]
      %v359 = vld [vmem:[%s0 + $0x40] sm:$0xff]
      %v360 = vld [vmem:[%s0 + $0x48] sm:$0xff]
      %v361 = vld [vmem:[%s0 + $0x50] sm:$0xff]
      %v362 = vld [vmem:[%s0 + $0x58] sm:$0xff]
      %v363 = vld [vmem:[%s0 + $0x60] sm:$0xff]
      %v364 = vld [vmem:[%s0 + $0x68] sm:$0xff]
      %v365 = vld [vmem:[%s0 + $0x70] sm:$0xff]
      %367 = vset.pattern.permute.xlu0 0
      %368 = vperm.xlu0 %367, %v351
      %v369 = vpop.permute.xlu0 %368
      %372 = vset.pattern.permute.xlu0 0
      %373 = vperm.xlu0 %372, %v352
      %v374 = vpop.permute.xlu0 %373
      %377 = vset.pattern.permute.xlu0 0
      %378 = vperm.xlu0 %377, %v353
      %v379 = vpop.permute.xlu0 %378
      %382 = vset.pattern.permute.xlu0 0
      %383 = vperm.xlu0 %382, %v354
      %v384 = vpop.permute.xlu0 %383
      %387 = vset.pattern.permute.xlu0 0
      %388 = vperm.xlu0 %387, %v355
      %v389 = vpop.permute.xlu0 %388
      %392 = vset.pattern.permute.xlu0 0
      %393 = vperm.xlu0 %392, %v356
      %v394 = vpop.permute.xlu0 %393
      %397 = vset.pattern.permute.xlu0 0
      %398 = vperm.xlu0 %397, %v357
      %v399 = vpop.permute.xlu0 %398
      %402 = vset.pattern.permute.xlu0 0
      %403 = vperm.xlu0 %402, %v358
      %v404 = vpop.permute.xlu0 %403
      %407 = vset.pattern.permute.xlu0 0
      %408 = vperm.xlu0 %407, %v359
      %v409 = vpop.permute.xlu0 %408
      %412 = vset.pattern.permute.xlu0 0
      %413 = vperm.xlu0 %412, %v360
      %v414 = vpop.permute.xlu0 %413
      %417 = vset.pattern.permute.xlu0 0
      %418 = vperm.xlu0 %417, %v361
      %v419 = vpop.permute.xlu0 %418
      %422 = vset.pattern.permute.xlu0 0
      %423 = vperm.xlu0 %422, %v362
      %v424 = vpop.permute.xlu0 %423
      %427 = vset.pattern.permute.xlu0 0
      %428 = vperm.xlu0 %427, %v363
      %v429 = vpop.permute.xlu0 %428
      %432 = vset.pattern.permute.xlu0 0
      %433 = vperm.xlu0 %432, %v364
      %v434 = vpop.permute.xlu0 %433
      %437 = vset.pattern.permute.xlu0 0
      %438 = vperm.xlu0 %437, %v365
      %v439 = vpop.permute.xlu0 %438
      %vm441 = vcmp.gt.f32.partialorder %v369, 0.0
      %vm442 = vcmp.gt.f32.partialorder %v374, 0.0
      %vm443 = vcmp.gt.f32.partialorder %v379, 0.0
      %vm444 = vcmp.gt.f32.partialorder %v384, 0.0
      %vm445 = vcmp.gt.f32.partialorder %v389, 0.0
      %vm446 = vcmp.gt.f32.partialorder %v394, 0.0
      %vm447 = vcmp.gt.f32.partialorder %v399, 0.0
      %vm448 = vcmp.gt.f32.partialorder %v404, 0.0
      %vm449 = vcmp.gt.f32.partialorder %v409, 0.0
      %vm450 = vcmp.gt.f32.partialorder %v414, 0.0
      %vm451 = vcmp.gt.f32.partialorder %v419, 0.0
      %vm452 = vcmp.gt.f32.partialorder %v424, 0.0
      %vm453 = vcmp.gt.f32.partialorder %v429, 0.0
      %vm454 = vcmp.gt.f32.partialorder %v434, 0.0
      %vm455 = vcmp.gt.f32.partialorder %v439, 0.0
      %v456 = vld [vmem:[#allocation2] sm:$0xff]
      %v457 = vld [vmem:[#allocation2 + $0x8] sm:$0xff]
      %v458 = vld [vmem:[#allocation2 + $0x10] sm:$0xff]
      %v459 = vld [vmem:[#allocation2 + $0x18] sm:$0xff]
      %v460 = vld [vmem:[#allocation2 + $0x20] sm:$0xff]
      %v461 = vld [vmem:[#allocation2 + $0x28] sm:$0xff]
      %v462 = vld [vmem:[#allocation2 + $0x30] sm:$0xff]
      %v463 = vld [vmem:[#allocation2 + $0x38] sm:$0xff]
      %v464 = vld [vmem:[#allocation2 + $0x40] sm:$0xff]
      %v465 = vld [vmem:[#allocation2 + $0x48] sm:$0xff]
      %v466 = vld [vmem:[#allocation2 + $0x50] sm:$0xff]
      %v467 = vld [vmem:[#allocation2 + $0x58] sm:$0xff]
      %v468 = vld [vmem:[#allocation2 + $0x60] sm:$0xff]
      %v469 = vld [vmem:[#allocation2 + $0x68] sm:$0xff]
      %v470 = vld [vmem:[#allocation2 + $0x70] sm:$0xff]
      %v471 = vld [vmem:[%s227] sm:$0x1]
      %v472 = vld [vmem:[%s234] sm:$0x1]
      %v474 = vlaneseq
      %v475 = vshrl.u32 %v474, 7
      %v476 = vsub.s32 0, %v475
      %v477 = vrot.slane %v471, %v476
      %v480 = vlaneseq
      %v481 = vshrl.u32 %v480, 7
      %v482 = vsub.s32 0, %v481
      %v483 = vrot.slane %v472, %v482
      %v485 = vsel %vm441, %v477, %v483
      %v486 = vsel %vm442, %v477, %v483
      %v487 = vsel %vm443, %v477, %v483
      %v488 = vsel %vm444, %v477, %v483
      %v489 = vsel %vm445, %v477, %v483
      %v490 = vsel %vm446, %v477, %v483
      %v491 = vsel %vm447, %v477, %v483
      %v492 = vsel %vm448, %v477, %v483
      %v493 = vsel %vm449, %v477, %v483
      %v494 = vsel %vm450, %v477, %v483
      %v495 = vsel %vm451, %v477, %v483
      %v496 = vsel %vm452, %v477, %v483
      %v497 = vsel %vm453, %v477, %v483
      %v498 = vsel %vm454, %v477, %v483
      %v499 = vsel %vm455, %v477, %v483
      %v500 = vsub.f32 %v485, %v279
      %v501 = vsub.f32 %v486, %v284
      %v502 = vsub.f32 %v487, %v289
      %v503 = vsub.f32 %v488, %v294
      %v504 = vsub.f32 %v489, %v299
      %v505 = vsub.f32 %v490, %v304
      %v506 = vsub.f32 %v491, %v309
      %v507 = vsub.f32 %v492, %v314
      %v508 = vsub.f32 %v493, %v319
      %v509 = vsub.f32 %v494, %v324
      %v510 = vsub.f32 %v495, %v329
      %v511 = vsub.f32 %v496, %v334
      %v512 = vsub.f32 %v497, %v339
      %v513 = vsub.f32 %v498, %v344
      %v514 = vsub.f32 %v499, %v349
      %v515 = vmax.f32 %v500, 0.0
      %v516 = vmax.f32 %v501, 0.0
      %v517 = vmax.f32 %v502, 0.0
      %v518 = vmax.f32 %v503, 0.0
      %v519 = vmax.f32 %v504, 0.0
      %v520 = vmax.f32 %v505, 0.0
      %v521 = vmax.f32 %v506, 0.0
      %v522 = vmax.f32 %v507, 0.0
      %v523 = vmax.f32 %v508, 0.0
      %v524 = vmax.f32 %v509, 0.0
      %v525 = vmax.f32 %v510, 0.0
      %v526 = vmax.f32 %v511, 0.0
      %v527 = vmax.f32 %v512, 0.0
      %v528 = vmax.f32 %v513, 0.0
      %v529 = vmax.f32 %v514, 0.0
      %v530 = vmul.f32 %v515, %v515
      %v531 = vmul.f32 %v516, %v516
      %v532 = vmul.f32 %v517, %v517
      %v533 = vmul.f32 %v518, %v518
      %v534 = vmul.f32 %v519, %v519
      %v535 = vmul.f32 %v520, %v520
      %v536 = vmul.f32 %v521, %v521
      %v537 = vmul.f32 %v522, %v522
      %v538 = vmul.f32 %v523, %v523
      %v539 = vmul.f32 %v524, %v524
      %v540 = vmul.f32 %v525, %v525
      %v541 = vmul.f32 %v526, %v526
      %v542 = vmul.f32 %v527, %v527
      %v543 = vmul.f32 %v528, %v528
      %v544 = vmul.f32 %v529, %v529
      %v545 = vadd.f32 %v456, %v530
      %v546 = vadd.f32 %v457, %v531
      %v547 = vadd.f32 %v458, %v532
      %v548 = vadd.f32 %v459, %v533
      %v549 = vadd.f32 %v460, %v534
      %v550 = vadd.f32 %v461, %v535
      %v551 = vadd.f32 %v462, %v536
      %v552 = vadd.f32 %v463, %v537
      %v553 = vadd.f32 %v464, %v538
      %v554 = vadd.f32 %v465, %v539
      %v555 = vadd.f32 %v466, %v540
      %v556 = vadd.f32 %v467, %v541
      %v557 = vadd.f32 %v468, %v542
      %v558 = vadd.f32 %v469, %v543
      %v559 = vadd.f32 %v470, %v544
      %s560 = scalar_lea.vmem %s227, 1
      %v561 = vld [vmem:[%s560] sm:$0x1]
      %s562 = scalar_lea.vmem %s234, 1
      %v563 = vld [vmem:[%s562] sm:$0x1]
      %v565 = vlaneseq
      %v566 = vshrl.u32 %v565, 7
      %v567 = vsub.s32 0, %v566
      %v568 = vrot.slane %v561, %v567
      %v571 = vlaneseq
      %v572 = vshrl.u32 %v571, 7
      %v573 = vsub.s32 0, %v572
      %v574 = vrot.slane %v563, %v573
      %v576 = vsel %vm441, %v568, %v574
      %v577 = vsel %vm442, %v568, %v574
      %v578 = vsel %vm443, %v568, %v574
      %v579 = vsel %vm444, %v568, %v574
      %v580 = vsel %vm445, %v568, %v574
      %v581 = vsel %vm446, %v568, %v574
      %v582 = vsel %vm447, %v568, %v574
      %v583 = vsel %vm448, %v568, %v574
      %v584 = vsel %vm449, %v568, %v574
      %v585 = vsel %vm450, %v568, %v574
      %v586 = vsel %vm451, %v568, %v574
      %v587 = vsel %vm452, %v568, %v574
      %v588 = vsel %vm453, %v568, %v574
      %v589 = vsel %vm454, %v568, %v574
      %v590 = vsel %vm455, %v568, %v574
      %v591 = vsub.f32 %v576, %v279
      %v592 = vsub.f32 %v577, %v284
      %v593 = vsub.f32 %v578, %v289
      %v594 = vsub.f32 %v579, %v294
      %v595 = vsub.f32 %v580, %v299
      %v596 = vsub.f32 %v581, %v304
      %v597 = vsub.f32 %v582, %v309
      %v598 = vsub.f32 %v583, %v314
      %v599 = vsub.f32 %v584, %v319
      %v600 = vsub.f32 %v585, %v324
      %v601 = vsub.f32 %v586, %v329
      %v602 = vsub.f32 %v587, %v334
      %v603 = vsub.f32 %v588, %v339
      %v604 = vsub.f32 %v589, %v344
      %v605 = vsub.f32 %v590, %v349
      %v606 = vmax.f32 %v591, 0.0
      %v607 = vmax.f32 %v592, 0.0
      %v608 = vmax.f32 %v593, 0.0
      %v609 = vmax.f32 %v594, 0.0
      %v610 = vmax.f32 %v595, 0.0
      %v611 = vmax.f32 %v596, 0.0
      %v612 = vmax.f32 %v597, 0.0
      %v613 = vmax.f32 %v598, 0.0
      %v614 = vmax.f32 %v599, 0.0
      %v615 = vmax.f32 %v600, 0.0
      %v616 = vmax.f32 %v601, 0.0
      %v617 = vmax.f32 %v602, 0.0
      %v618 = vmax.f32 %v603, 0.0
      %v619 = vmax.f32 %v604, 0.0
      %v620 = vmax.f32 %v605, 0.0
      %v621 = vmul.f32 %v606, %v606
      %v622 = vmul.f32 %v607, %v607
      %v623 = vmul.f32 %v608, %v608
      %v624 = vmul.f32 %v609, %v609
      %v625 = vmul.f32 %v610, %v610
      %v626 = vmul.f32 %v611, %v611
      %v627 = vmul.f32 %v612, %v612
      %v628 = vmul.f32 %v613, %v613
      %v629 = vmul.f32 %v614, %v614
      %v630 = vmul.f32 %v615, %v615
      %v631 = vmul.f32 %v616, %v616
      %v632 = vmul.f32 %v617, %v617
      %v633 = vmul.f32 %v618, %v618
      %v634 = vmul.f32 %v619, %v619
      %v635 = vmul.f32 %v620, %v620
      %v636 = vadd.f32 %v545, %v621
      %v637 = vadd.f32 %v546, %v622
      %v638 = vadd.f32 %v547, %v623
      %v639 = vadd.f32 %v548, %v624
      %v640 = vadd.f32 %v549, %v625
      %v641 = vadd.f32 %v550, %v626
      %v642 = vadd.f32 %v551, %v627
      %v643 = vadd.f32 %v552, %v628
      %v644 = vadd.f32 %v553, %v629
      %v645 = vadd.f32 %v554, %v630
      %v646 = vadd.f32 %v555, %v631
      %v647 = vadd.f32 %v556, %v632
      %v648 = vadd.f32 %v557, %v633
      %v649 = vadd.f32 %v558, %v634
      %v650 = vadd.f32 %v559, %v635
      %s651 = scalar_lea.vmem %s227, 2
      %v652 = vld [vmem:[%s651] sm:$0x1]
      %s653 = scalar_lea.vmem %s234, 2
      %v654 = vld [vmem:[%s653] sm:$0x1]
      %v656 = vlaneseq
      %v657 = vshrl.u32 %v656, 7
      %v658 = vsub.s32 0, %v657
      %v659 = vrot.slane %v652, %v658
      %v662 = vlaneseq
      %v663 = vshrl.u32 %v662, 7
      %v664 = vsub.s32 0, %v663
      %v665 = vrot.slane %v654, %v664
      %v667 = vsel %vm441, %v659, %v665
      %v668 = vsel %vm442, %v659, %v665
      %v669 = vsel %vm443, %v659, %v665
      %v670 = vsel %vm444, %v659, %v665
      %v671 = vsel %vm445, %v659, %v665
      %v672 = vsel %vm446, %v659, %v665
      %v673 = vsel %vm447, %v659, %v665
      %v674 = vsel %vm448, %v659, %v665
      %v675 = vsel %vm449, %v659, %v665
      %v676 = vsel %vm450, %v659, %v665
      %v677 = vsel %vm451, %v659, %v665
      %v678 = vsel %vm452, %v659, %v665
      %v679 = vsel %vm453, %v659, %v665
      %v680 = vsel %vm454, %v659, %v665
      %v681 = vsel %vm455, %v659, %v665
      %v682 = vsub.f32 %v667, %v279
      %v683 = vsub.f32 %v668, %v284
      %v684 = vsub.f32 %v669, %v289
      %v685 = vsub.f32 %v670, %v294
      %v686 = vsub.f32 %v671, %v299
      %v687 = vsub.f32 %v672, %v304
      %v688 = vsub.f32 %v673, %v309
      %v689 = vsub.f32 %v674, %v314
      %v690 = vsub.f32 %v675, %v319
      %v691 = vsub.f32 %v676, %v324
      %v692 = vsub.f32 %v677, %v329
      %v693 = vsub.f32 %v678, %v334
      %v694 = vsub.f32 %v679, %v339
      %v695 = vsub.f32 %v680, %v344
      %v696 = vsub.f32 %v681, %v349
      %v697 = vmax.f32 %v682, 0.0
      %v698 = vmax.f32 %v683, 0.0
      %v699 = vmax.f32 %v684, 0.0
      %v700 = vmax.f32 %v685, 0.0
      %v701 = vmax.f32 %v686, 0.0
      %v702 = vmax.f32 %v687, 0.0
      %v703 = vmax.f32 %v688, 0.0
      %v704 = vmax.f32 %v689, 0.0
      %v705 = vmax.f32 %v690, 0.0
      %v706 = vmax.f32 %v691, 0.0
      %v707 = vmax.f32 %v692, 0.0
      %v708 = vmax.f32 %v693, 0.0
      %v709 = vmax.f32 %v694, 0.0
      %v710 = vmax.f32 %v695, 0.0
      %v711 = vmax.f32 %v696, 0.0
      %v712 = vmul.f32 %v697, %v697
      %v713 = vmul.f32 %v698, %v698
      %v714 = vmul.f32 %v699, %v699
      %v715 = vmul.f32 %v700, %v700
      %v716 = vmul.f32 %v701, %v701
      %v717 = vmul.f32 %v702, %v702
      %v718 = vmul.f32 %v703, %v703
      %v719 = vmul.f32 %v704, %v704
      %v720 = vmul.f32 %v705, %v705
      %v721 = vmul.f32 %v706, %v706
      %v722 = vmul.f32 %v707, %v707
      %v723 = vmul.f32 %v708, %v708
      %v724 = vmul.f32 %v709, %v709
      %v725 = vmul.f32 %v710, %v710
      %v726 = vmul.f32 %v711, %v711
      %v727 = vadd.f32 %v636, %v712
      %v728 = vadd.f32 %v637, %v713
      %v729 = vadd.f32 %v638, %v714
      %v730 = vadd.f32 %v639, %v715
      %v731 = vadd.f32 %v640, %v716
      %v732 = vadd.f32 %v641, %v717
      %v733 = vadd.f32 %v642, %v718
      %v734 = vadd.f32 %v643, %v719
      %v735 = vadd.f32 %v644, %v720
      %v736 = vadd.f32 %v645, %v721
      %v737 = vadd.f32 %v646, %v722
      %v738 = vadd.f32 %v647, %v723
      %v739 = vadd.f32 %v648, %v724
      %v740 = vadd.f32 %v649, %v725
      %v741 = vadd.f32 %v650, %v726
      %s742 = scalar_lea.vmem %s227, 3
      %v743 = vld [vmem:[%s742] sm:$0x1]
      %s744 = scalar_lea.vmem %s234, 3
      %v745 = vld [vmem:[%s744] sm:$0x1]
      %v747 = vlaneseq
      %v748 = vshrl.u32 %v747, 7
      %v749 = vsub.s32 0, %v748
      %v750 = vrot.slane %v743, %v749
      %v753 = vlaneseq
      %v754 = vshrl.u32 %v753, 7
      %v755 = vsub.s32 0, %v754
      %v756 = vrot.slane %v745, %v755
      %v758 = vsel %vm441, %v750, %v756
      %v759 = vsel %vm442, %v750, %v756
      %v760 = vsel %vm443, %v750, %v756
      %v761 = vsel %vm444, %v750, %v756
      %v762 = vsel %vm445, %v750, %v756
      %v763 = vsel %vm446, %v750, %v756
      %v764 = vsel %vm447, %v750, %v756
      %v765 = vsel %vm448, %v750, %v756
      %v766 = vsel %vm449, %v750, %v756
      %v767 = vsel %vm450, %v750, %v756
      %v768 = vsel %vm451, %v750, %v756
      %v769 = vsel %vm452, %v750, %v756
      %v770 = vsel %vm453, %v750, %v756
      %v771 = vsel %vm454, %v750, %v756
      %v772 = vsel %vm455, %v750, %v756
      %v773 = vsub.f32 %v758, %v279
      %v774 = vsub.f32 %v759, %v284
      %v775 = vsub.f32 %v760, %v289
      %v776 = vsub.f32 %v761, %v294
      %v777 = vsub.f32 %v762, %v299
      %v778 = vsub.f32 %v763, %v304
      %v779 = vsub.f32 %v764, %v309
      %v780 = vsub.f32 %v765, %v314
      %v781 = vsub.f32 %v766, %v319
      %v782 = vsub.f32 %v767, %v324
      %v783 = vsub.f32 %v768, %v329
      %v784 = vsub.f32 %v769, %v334
      %v785 = vsub.f32 %v770, %v339
      %v786 = vsub.f32 %v771, %v344
      %v787 = vsub.f32 %v772, %v349
      %v788 = vmax.f32 %v773, 0.0
      %v789 = vmax.f32 %v774, 0.0
      %v790 = vmax.f32 %v775, 0.0
      %v791 = vmax.f32 %v776, 0.0
      %v792 = vmax.f32 %v777, 0.0
      %v793 = vmax.f32 %v778, 0.0
      %v794 = vmax.f32 %v779, 0.0
      %v795 = vmax.f32 %v780, 0.0
      %v796 = vmax.f32 %v781, 0.0
      %v797 = vmax.f32 %v782, 0.0
      %v798 = vmax.f32 %v783, 0.0
      %v799 = vmax.f32 %v784, 0.0
      %v800 = vmax.f32 %v785, 0.0
      %v801 = vmax.f32 %v786, 0.0
      %v802 = vmax.f32 %v787, 0.0
      %v803 = vmul.f32 %v788, %v788
      %v804 = vmul.f32 %v789, %v789
      %v805 = vmul.f32 %v790, %v790
      %v806 = vmul.f32 %v791, %v791
      %v807 = vmul.f32 %v792, %v792
      %v808 = vmul.f32 %v793, %v793
      %v809 = vmul.f32 %v794, %v794
      %v810 = vmul.f32 %v795, %v795
      %v811 = vmul.f32 %v796, %v796
      %v812 = vmul.f32 %v797, %v797
      %v813 = vmul.f32 %v798, %v798
      %v814 = vmul.f32 %v799, %v799
      %v815 = vmul.f32 %v800, %v800
      %v816 = vmul.f32 %v801, %v801
      %v817 = vmul.f32 %v802, %v802
      %v818 = vadd.f32 %v727, %v803
      %v819 = vadd.f32 %v728, %v804
      %v820 = vadd.f32 %v729, %v805
      %v821 = vadd.f32 %v730, %v806
      %v822 = vadd.f32 %v731, %v807
      %v823 = vadd.f32 %v732, %v808
      %v824 = vadd.f32 %v733, %v809
      %v825 = vadd.f32 %v734, %v810
      %v826 = vadd.f32 %v735, %v811
      %v827 = vadd.f32 %v736, %v812
      %v828 = vadd.f32 %v737, %v813
      %v829 = vadd.f32 %v738, %v814
      %v830 = vadd.f32 %v739, %v815
      %v831 = vadd.f32 %v740, %v816
      %v832 = vadd.f32 %v741, %v817
      %s833 = scalar_lea.vmem %s227, 4
      %v834 = vld [vmem:[%s833] sm:$0x1]
      %s835 = scalar_lea.vmem %s234, 4
      %v836 = vld [vmem:[%s835] sm:$0x1]
      %v838 = vlaneseq
      %v839 = vshrl.u32 %v838, 7
      %v840 = vsub.s32 0, %v839
      %v841 = vrot.slane %v834, %v840
      %v844 = vlaneseq
      %v845 = vshrl.u32 %v844, 7
      %v846 = vsub.s32 0, %v845
      %v847 = vrot.slane %v836, %v846
      %v849 = vsel %vm441, %v841, %v847
      %v850 = vsel %vm442, %v841, %v847
      %v851 = vsel %vm443, %v841, %v847
      %v852 = vsel %vm444, %v841, %v847
      %v853 = vsel %vm445, %v841, %v847
      %v854 = vsel %vm446, %v841, %v847
      %v855 = vsel %vm447, %v841, %v847
      %v856 = vsel %vm448, %v841, %v847
      %v857 = vsel %vm449, %v841, %v847
      %v858 = vsel %vm450, %v841, %v847
      %v859 = vsel %vm451, %v841, %v847
      %v860 = vsel %vm452, %v841, %v847
      %v861 = vsel %vm453, %v841, %v847
      %v862 = vsel %vm454, %v841, %v847
      %v863 = vsel %vm455, %v841, %v847
      %v864 = vsub.f32 %v849, %v279
      %v865 = vsub.f32 %v850, %v284
      %v866 = vsub.f32 %v851, %v289
      %v867 = vsub.f32 %v852, %v294
      %v868 = vsub.f32 %v853, %v299
      %v869 = vsub.f32 %v854, %v304
      %v870 = vsub.f32 %v855, %v309
      %v871 = vsub.f32 %v856, %v314
      %v872 = vsub.f32 %v857, %v319
      %v873 = vsub.f32 %v858, %v324
      %v874 = vsub.f32 %v859, %v329
      %v875 = vsub.f32 %v860, %v334
      %v876 = vsub.f32 %v861, %v339
      %v877 = vsub.f32 %v862, %v344
      %v878 = vsub.f32 %v863, %v349
      %v879 = vmax.f32 %v864, 0.0
      %v880 = vmax.f32 %v865, 0.0
      %v881 = vmax.f32 %v866, 0.0
      %v882 = vmax.f32 %v867, 0.0
      %v883 = vmax.f32 %v868, 0.0
      %v884 = vmax.f32 %v869, 0.0
      %v885 = vmax.f32 %v870, 0.0
      %v886 = vmax.f32 %v871, 0.0
      %v887 = vmax.f32 %v872, 0.0
      %v888 = vmax.f32 %v873, 0.0
      %v889 = vmax.f32 %v874, 0.0
      %v890 = vmax.f32 %v875, 0.0
      %v891 = vmax.f32 %v876, 0.0
      %v892 = vmax.f32 %v877, 0.0
      %v893 = vmax.f32 %v878, 0.0
      %v894 = vmul.f32 %v879, %v879
      %v895 = vmul.f32 %v880, %v880
      %v896 = vmul.f32 %v881, %v881
      %v897 = vmul.f32 %v882, %v882
      %v898 = vmul.f32 %v883, %v883
      %v899 = vmul.f32 %v884, %v884
      %v900 = vmul.f32 %v885, %v885
      %v901 = vmul.f32 %v886, %v886
      %v902 = vmul.f32 %v887, %v887
      %v903 = vmul.f32 %v888, %v888
      %v904 = vmul.f32 %v889, %v889
      %v905 = vmul.f32 %v890, %v890
      %v906 = vmul.f32 %v891, %v891
      %v907 = vmul.f32 %v892, %v892
      %v908 = vmul.f32 %v893, %v893
      %v909 = vadd.f32 %v818, %v894
      %v910 = vadd.f32 %v819, %v895
      %v911 = vadd.f32 %v820, %v896
      %v912 = vadd.f32 %v821, %v897
      %v913 = vadd.f32 %v822, %v898
      %v914 = vadd.f32 %v823, %v899
      %v915 = vadd.f32 %v824, %v900
      %v916 = vadd.f32 %v825, %v901
      %v917 = vadd.f32 %v826, %v902
      %v918 = vadd.f32 %v827, %v903
      %v919 = vadd.f32 %v828, %v904
      %v920 = vadd.f32 %v829, %v905
      %v921 = vadd.f32 %v830, %v906
      %v922 = vadd.f32 %v831, %v907
      %v923 = vadd.f32 %v832, %v908
      %s924 = scalar_lea.vmem %s227, 5
      %v925 = vld [vmem:[%s924] sm:$0x1]
      %s926 = scalar_lea.vmem %s234, 5
      %v927 = vld [vmem:[%s926] sm:$0x1]
      %v929 = vlaneseq
      %v930 = vshrl.u32 %v929, 7
      %v931 = vsub.s32 0, %v930
      %v932 = vrot.slane %v925, %v931
      %v935 = vlaneseq
      %v936 = vshrl.u32 %v935, 7
      %v937 = vsub.s32 0, %v936
      %v938 = vrot.slane %v927, %v937
      %v940 = vsel %vm441, %v932, %v938
      %v941 = vsel %vm442, %v932, %v938
      %v942 = vsel %vm443, %v932, %v938
      %v943 = vsel %vm444, %v932, %v938
      %v944 = vsel %vm445, %v932, %v938
      %v945 = vsel %vm446, %v932, %v938
      %v946 = vsel %vm447, %v932, %v938
      %v947 = vsel %vm448, %v932, %v938
      %v948 = vsel %vm449, %v932, %v938
      %v949 = vsel %vm450, %v932, %v938
      %v950 = vsel %vm451, %v932, %v938
      %v951 = vsel %vm452, %v932, %v938
      %v952 = vsel %vm453, %v932, %v938
      %v953 = vsel %vm454, %v932, %v938
      %v954 = vsel %vm455, %v932, %v938
      %v955 = vsub.f32 %v940, %v279
      %v956 = vsub.f32 %v941, %v284
      %v957 = vsub.f32 %v942, %v289
      %v958 = vsub.f32 %v943, %v294
      %v959 = vsub.f32 %v944, %v299
      %v960 = vsub.f32 %v945, %v304
      %v961 = vsub.f32 %v946, %v309
      %v962 = vsub.f32 %v947, %v314
      %v963 = vsub.f32 %v948, %v319
      %v964 = vsub.f32 %v949, %v324
      %v965 = vsub.f32 %v950, %v329
      %v966 = vsub.f32 %v951, %v334
      %v967 = vsub.f32 %v952, %v339
      %v968 = vsub.f32 %v953, %v344
      %v969 = vsub.f32 %v954, %v349
      %v970 = vmax.f32 %v955, 0.0
      %v971 = vmax.f32 %v956, 0.0
      %v972 = vmax.f32 %v957, 0.0
      %v973 = vmax.f32 %v958, 0.0
      %v974 = vmax.f32 %v959, 0.0
      %v975 = vmax.f32 %v960, 0.0
      %v976 = vmax.f32 %v961, 0.0
      %v977 = vmax.f32 %v962, 0.0
      %v978 = vmax.f32 %v963, 0.0
      %v979 = vmax.f32 %v964, 0.0
      %v980 = vmax.f32 %v965, 0.0
      %v981 = vmax.f32 %v966, 0.0
      %v982 = vmax.f32 %v967, 0.0
      %v983 = vmax.f32 %v968, 0.0
      %v984 = vmax.f32 %v969, 0.0
      %v985 = vmul.f32 %v970, %v970
      %v986 = vmul.f32 %v971, %v971
      %v987 = vmul.f32 %v972, %v972
      %v988 = vmul.f32 %v973, %v973
      %v989 = vmul.f32 %v974, %v974
      %v990 = vmul.f32 %v975, %v975
      %v991 = vmul.f32 %v976, %v976
      %v992 = vmul.f32 %v977, %v977
      %v993 = vmul.f32 %v978, %v978
      %v994 = vmul.f32 %v979, %v979
      %v995 = vmul.f32 %v980, %v980
      %v996 = vmul.f32 %v981, %v981
      %v997 = vmul.f32 %v982, %v982
      %v998 = vmul.f32 %v983, %v983
      %v999 = vmul.f32 %v984, %v984
      %v1000 = vadd.f32 %v909, %v985
      %v1001 = vadd.f32 %v910, %v986
      %v1002 = vadd.f32 %v911, %v987
      %v1003 = vadd.f32 %v912, %v988
      %v1004 = vadd.f32 %v913, %v989
      %v1005 = vadd.f32 %v914, %v990
      %v1006 = vadd.f32 %v915, %v991
      %v1007 = vadd.f32 %v916, %v992
      %v1008 = vadd.f32 %v917, %v993
      %v1009 = vadd.f32 %v918, %v994
      %v1010 = vadd.f32 %v919, %v995
      %v1011 = vadd.f32 %v920, %v996
      %v1012 = vadd.f32 %v921, %v997
      %v1013 = vadd.f32 %v922, %v998
      %v1014 = vadd.f32 %v923, %v999
      %s1015 = scalar_lea.vmem %s227, 6
      %v1016 = vld [vmem:[%s1015] sm:$0x1]
      %s1017 = scalar_lea.vmem %s234, 6
      %v1018 = vld [vmem:[%s1017] sm:$0x1]
      %v1020 = vlaneseq
      %v1021 = vshrl.u32 %v1020, 7
      %v1022 = vsub.s32 0, %v1021
      %v1023 = vrot.slane %v1016, %v1022
      %v1026 = vlaneseq
      %v1027 = vshrl.u32 %v1026, 7
      %v1028 = vsub.s32 0, %v1027
      %v1029 = vrot.slane %v1018, %v1028
      %v1031 = vsel %vm441, %v1023, %v1029
      %v1032 = vsel %vm442, %v1023, %v1029
      %v1033 = vsel %vm443, %v1023, %v1029
      %v1034 = vsel %vm444, %v1023, %v1029
      %v1035 = vsel %vm445, %v1023, %v1029
      %v1036 = vsel %vm446, %v1023, %v1029
      %v1037 = vsel %vm447, %v1023, %v1029
      %v1038 = vsel %vm448, %v1023, %v1029
      %v1039 = vsel %vm449, %v1023, %v1029
      %v1040 = vsel %vm450, %v1023, %v1029
      %v1041 = vsel %vm451, %v1023, %v1029
      %v1042 = vsel %vm452, %v1023, %v1029
      %v1043 = vsel %vm453, %v1023, %v1029
      %v1044 = vsel %vm454, %v1023, %v1029
      %v1045 = vsel %vm455, %v1023, %v1029
      %v1046 = vsub.f32 %v1031, %v279
      %v1047 = vsub.f32 %v1032, %v284
      %v1048 = vsub.f32 %v1033, %v289
      %v1049 = vsub.f32 %v1034, %v294
      %v1050 = vsub.f32 %v1035, %v299
      %v1051 = vsub.f32 %v1036, %v304
      %v1052 = vsub.f32 %v1037, %v309
      %v1053 = vsub.f32 %v1038, %v314
      %v1054 = vsub.f32 %v1039, %v319
      %v1055 = vsub.f32 %v1040, %v324
      %v1056 = vsub.f32 %v1041, %v329
      %v1057 = vsub.f32 %v1042, %v334
      %v1058 = vsub.f32 %v1043, %v339
      %v1059 = vsub.f32 %v1044, %v344
      %v1060 = vsub.f32 %v1045, %v349
      %v1061 = vmax.f32 %v1046, 0.0
      %v1062 = vmax.f32 %v1047, 0.0
      %v1063 = vmax.f32 %v1048, 0.0
      %v1064 = vmax.f32 %v1049, 0.0
      %v1065 = vmax.f32 %v1050, 0.0
      %v1066 = vmax.f32 %v1051, 0.0
      %v1067 = vmax.f32 %v1052, 0.0
      %v1068 = vmax.f32 %v1053, 0.0
      %v1069 = vmax.f32 %v1054, 0.0
      %v1070 = vmax.f32 %v1055, 0.0
      %v1071 = vmax.f32 %v1056, 0.0
      %v1072 = vmax.f32 %v1057, 0.0
      %v1073 = vmax.f32 %v1058, 0.0
      %v1074 = vmax.f32 %v1059, 0.0
      %v1075 = vmax.f32 %v1060, 0.0
      %v1076 = vmul.f32 %v1061, %v1061
      %v1077 = vmul.f32 %v1062, %v1062
      %v1078 = vmul.f32 %v1063, %v1063
      %v1079 = vmul.f32 %v1064, %v1064
      %v1080 = vmul.f32 %v1065, %v1065
      %v1081 = vmul.f32 %v1066, %v1066
      %v1082 = vmul.f32 %v1067, %v1067
      %v1083 = vmul.f32 %v1068, %v1068
      %v1084 = vmul.f32 %v1069, %v1069
      %v1085 = vmul.f32 %v1070, %v1070
      %v1086 = vmul.f32 %v1071, %v1071
      %v1087 = vmul.f32 %v1072, %v1072
      %v1088 = vmul.f32 %v1073, %v1073
      %v1089 = vmul.f32 %v1074, %v1074
      %v1090 = vmul.f32 %v1075, %v1075
      %v1091 = vadd.f32 %v1000, %v1076
      %v1092 = vadd.f32 %v1001, %v1077
      %v1093 = vadd.f32 %v1002, %v1078
      %v1094 = vadd.f32 %v1003, %v1079
      %v1095 = vadd.f32 %v1004, %v1080
      %v1096 = vadd.f32 %v1005, %v1081
      %v1097 = vadd.f32 %v1006, %v1082
      %v1098 = vadd.f32 %v1007, %v1083
      %v1099 = vadd.f32 %v1008, %v1084
      %v1100 = vadd.f32 %v1009, %v1085
      %v1101 = vadd.f32 %v1010, %v1086
      %v1102 = vadd.f32 %v1011, %v1087
      %v1103 = vadd.f32 %v1012, %v1088
      %v1104 = vadd.f32 %v1013, %v1089
      %v1105 = vadd.f32 %v1014, %v1090
      %s1106 = scalar_lea.vmem %s227, 7
      %v1107 = vld [vmem:[%s1106] sm:$0x1]
      %s1108 = scalar_lea.vmem %s234, 7
      %v1109 = vld [vmem:[%s1108] sm:$0x1]
      %v1111 = vlaneseq
      %v1112 = vshrl.u32 %v1111, 7
      %v1113 = vsub.s32 0, %v1112
      %v1114 = vrot.slane %v1107, %v1113
      %v1117 = vlaneseq
      %v1118 = vshrl.u32 %v1117, 7
      %v1119 = vsub.s32 0, %v1118
      %v1120 = vrot.slane %v1109, %v1119
      %v1122 = vsel %vm441, %v1114, %v1120
      %v1123 = vsel %vm442, %v1114, %v1120
      %v1124 = vsel %vm443, %v1114, %v1120
      %v1125 = vsel %vm444, %v1114, %v1120
      %v1126 = vsel %vm445, %v1114, %v1120
      %v1127 = vsel %vm446, %v1114, %v1120
      %v1128 = vsel %vm447, %v1114, %v1120
      %v1129 = vsel %vm448, %v1114, %v1120
      %v1130 = vsel %vm449, %v1114, %v1120
      %v1131 = vsel %vm450, %v1114, %v1120
      %v1132 = vsel %vm451, %v1114, %v1120
      %v1133 = vsel %vm452, %v1114, %v1120
      %v1134 = vsel %vm453, %v1114, %v1120
      %v1135 = vsel %vm454, %v1114, %v1120
      %v1136 = vsel %vm455, %v1114, %v1120
      %v1137 = vsub.f32 %v1122, %v279
      %v1138 = vsub.f32 %v1123, %v284
      %v1139 = vsub.f32 %v1124, %v289
      %v1140 = vsub.f32 %v1125, %v294
      %v1141 = vsub.f32 %v1126, %v299
      %v1142 = vsub.f32 %v1127, %v304
      %v1143 = vsub.f32 %v1128, %v309
      %v1144 = vsub.f32 %v1129, %v314
      %v1145 = vsub.f32 %v1130, %v319
      %v1146 = vsub.f32 %v1131, %v324
      %v1147 = vsub.f32 %v1132, %v329
      %v1148 = vsub.f32 %v1133, %v334
      %v1149 = vsub.f32 %v1134, %v339
      %v1150 = vsub.f32 %v1135, %v344
      %v1151 = vsub.f32 %v1136, %v349
      %v1152 = vmax.f32 %v1137, 0.0
      %v1153 = vmax.f32 %v1138, 0.0
      %v1154 = vmax.f32 %v1139, 0.0
      %v1155 = vmax.f32 %v1140, 0.0
      %v1156 = vmax.f32 %v1141, 0.0
      %v1157 = vmax.f32 %v1142, 0.0
      %v1158 = vmax.f32 %v1143, 0.0
      %v1159 = vmax.f32 %v1144, 0.0
      %v1160 = vmax.f32 %v1145, 0.0
      %v1161 = vmax.f32 %v1146, 0.0
      %v1162 = vmax.f32 %v1147, 0.0
      %v1163 = vmax.f32 %v1148, 0.0
      %v1164 = vmax.f32 %v1149, 0.0
      %v1165 = vmax.f32 %v1150, 0.0
      %v1166 = vmax.f32 %v1151, 0.0
      %v1167 = vmul.f32 %v1152, %v1152
      %v1168 = vmul.f32 %v1153, %v1153
      %v1169 = vmul.f32 %v1154, %v1154
      %v1170 = vmul.f32 %v1155, %v1155
      %v1171 = vmul.f32 %v1156, %v1156
      %v1172 = vmul.f32 %v1157, %v1157
      %v1173 = vmul.f32 %v1158, %v1158
      %v1174 = vmul.f32 %v1159, %v1159
      %v1175 = vmul.f32 %v1160, %v1160
      %v1176 = vmul.f32 %v1161, %v1161
      %v1177 = vmul.f32 %v1162, %v1162
      %v1178 = vmul.f32 %v1163, %v1163
      %v1179 = vmul.f32 %v1164, %v1164
      %v1180 = vmul.f32 %v1165, %v1165
      %v1181 = vmul.f32 %v1166, %v1166
      %v1182 = vadd.f32 %v1091, %v1167
      %v1183 = vadd.f32 %v1092, %v1168
      %v1184 = vadd.f32 %v1093, %v1169
      %v1185 = vadd.f32 %v1094, %v1170
      %v1186 = vadd.f32 %v1095, %v1171
      %v1187 = vadd.f32 %v1096, %v1172
      %v1188 = vadd.f32 %v1097, %v1173
      %v1189 = vadd.f32 %v1098, %v1174
      %v1190 = vadd.f32 %v1099, %v1175
      %v1191 = vadd.f32 %v1100, %v1176
      %v1192 = vadd.f32 %v1101, %v1177
      %v1193 = vadd.f32 %v1102, %v1178
      %v1194 = vadd.f32 %v1103, %v1179
      %v1195 = vadd.f32 %v1104, %v1180
      %v1196 = vadd.f32 %v1105, %v1181
      %1197 = vst [vmem:[#allocation2] sm:$0xff] %v1182
      %1198 = vst [vmem:[#allocation2 + $0x8] sm:$0xff] %v1183
      %1199 = vst [vmem:[#allocation2 + $0x10] sm:$0xff] %v1184
      %1200 = vst [vmem:[#allocation2 + $0x18] sm:$0xff] %v1185
      %1201 = vst [vmem:[#allocation2 + $0x20] sm:$0xff] %v1186
      %1202 = vst [vmem:[#allocation2 + $0x28] sm:$0xff] %v1187
      %1203 = vst [vmem:[#allocation2 + $0x30] sm:$0xff] %v1188
      %1204 = vst [vmem:[#allocation2 + $0x38] sm:$0xff] %v1189
      %1205 = vst [vmem:[#allocation2 + $0x40] sm:$0xff] %v1190
      %1206 = vst [vmem:[#allocation2 + $0x48] sm:$0xff] %v1191
      %1207 = vst [vmem:[#allocation2 + $0x50] sm:$0xff] %v1192
      %1208 = vst [vmem:[#allocation2 + $0x58] sm:$0xff] %v1193
      %1209 = vst [vmem:[#allocation2 + $0x60] sm:$0xff] %v1194
      %1210 = vst [vmem:[#allocation2 + $0x68] sm:$0xff] %v1195
      %1211 = vst [vmem:[#allocation2 + $0x70] sm:$0xff] %v1196
      // Predicated region
      $region41: #{rocstar_forward.3} parent=35 // pred_check
        %p1212 = pneg %p242
      $region42: #{rocstar_forward.3} parent=35 // pred_check_branch
        %1214 = sbr.rel (%p1212) target = $region44
      $region43: #{rocstar_forward.3} parent=35 // pred_region
        %1215 = vadd.xlane.f32.xlu0 %v1182
        %v1216 = vpop.xlane.xlu0 %1215
        %1217 = vadd.xlane.f32.xlu0 %v1183
        %v1218 = vpop.xlane.xlu0 %1217
        %1219 = vadd.xlane.f32.xlu0 %v1184
        %v1220 = vpop.xlane.xlu0 %1219
        %1221 = vadd.xlane.f32.xlu0 %v1185
        %v1222 = vpop.xlane.xlu0 %1221
        %1223 = vadd.xlane.f32.xlu0 %v1186
        %v1224 = vpop.xlane.xlu0 %1223
        %1225 = vadd.xlane.f32.xlu0 %v1187
        %v1226 = vpop.xlane.xlu0 %1225
        %1227 = vadd.xlane.f32.xlu0 %v1188
        %v1228 = vpop.xlane.xlu0 %1227
        %1229 = vadd.xlane.f32.xlu0 %v1189
        %v1230 = vpop.xlane.xlu0 %1229
        %1231 = vadd.xlane.f32.xlu0 %v1190
        %v1232 = vpop.xlane.xlu0 %1231
        %1233 = vadd.xlane.f32.xlu0 %v1191
        %v1234 = vpop.xlane.xlu0 %1233
        %1235 = vadd.xlane.f32.xlu0 %v1192
        %v1236 = vpop.xlane.xlu0 %1235
        %1237 = vadd.xlane.f32.xlu0 %v1193
        %v1238 = vpop.xlane.xlu0 %1237
        %1239 = vadd.xlane.f32.xlu0 %v1194
        %v1240 = vpop.xlane.xlu0 %1239
        %1241 = vadd.xlane.f32.xlu0 %v1195
        %v1242 = vpop.xlane.xlu0 %1241
        %1243 = vadd.xlane.f32.xlu0 %v1196
        %v1244 = vpop.xlane.xlu0 %1243
        %vm1245 = vcmask 7168
        %1246 = vst.msk [vmem:[%s241] sm:$0xff] %vm1245, %v1216
        %1247 = vst.msk [vmem:[%s241 + $0x8] sm:$0xff] %vm1245, %v1218
        %1248 = vst.msk [vmem:[%s241 + $0x10] sm:$0xff] %vm1245, %v1220
        %1249 = vst.msk [vmem:[%s241 + $0x18] sm:$0xff] %vm1245, %v1222
        %1250 = vst.msk [vmem:[%s241 + $0x20] sm:$0xff] %vm1245, %v1224
        %1251 = vst.msk [vmem:[%s241 + $0x28] sm:$0xff] %vm1245, %v1226
        %1252 = vst.msk [vmem:[%s241 + $0x30] sm:$0xff] %vm1245, %v1228
        %1253 = vst.msk [vmem:[%s241 + $0x38] sm:$0xff] %vm1245, %v1230
        %1254 = vst.msk [vmem:[%s241 + $0x40] sm:$0xff] %vm1245, %v1232
        %1255 = vst.msk [vmem:[%s241 + $0x48] sm:$0xff] %vm1245, %v1234
        %1256 = vst.msk [vmem:[%s241 + $0x50] sm:$0xff] %vm1245, %v1236
        %1257 = vst.msk [vmem:[%s241 + $0x58] sm:$0xff] %vm1245, %v1238
        %1258 = vst.msk [vmem:[%s241 + $0x60] sm:$0xff] %vm1245, %v1240
        %1259 = vst.msk [vmem:[%s241 + $0x68] sm:$0xff] %vm1245, %v1242
        %1260 = vst.msk [vmem:[%s241 + $0x70] sm:$0xff] %vm1245, %v1244
      $region44: #{rocstar_forward.3} parent=35 // pred_fallthru
        _
      %p1261 = scmp.lt.s32.totalorder %s19, 1
      %s1262 = scalar_select %p1261, %s19, 1
      %s1263 = smul.addr %s1262, 15
      %s1264 = smul.addr %s1263, 8
      %s1265 = scalar_lea.vmem %s4, %s1264
      // Predicated region
      $region45: #{rocstar_forward.3} parent=35 // pred_check
        %p1266 = pneg %p143
      $region46: #{rocstar_forward.3} parent=35 // pred_check_branch
        %1268 = sbr.rel (%p1266) target = $region48
      $region47: #{rocstar_forward.3} parent=35 // pred_region
        _
      $region48: #{rocstar_forward.3} parent=35 // pred_fallthru
        _
    $region36: #{rocstar_forward.3} parent=5 // pred_fallthru
      _
    %p1269 = scmp.le.s32.totalorder 2, %s10
    // Predicated region
    $region49: #{rocstar_forward.3} parent=5 // pred_check
      %p1270 = pneg %p1269
    $region50: #{rocstar_forward.3} parent=5 // pred_check_branch
      %1272 = sbr.rel (%p1270) target = $region52
    $region51: #{rocstar_forward.3} parent=5 // pred_region
      %s1273 = ssub.s32 %s10, 2
      // Predicated region
      $region53: #{rocstar_forward.3} parent=51 // pred_check
        %p1274 = pneg %p149
      $region54: #{rocstar_forward.3} parent=51 // pred_check_branch
        %1276 = sbr.rel (%p1274) target = $region56
      $region55: #{rocstar_forward.3} parent=51 // pred_region
        %p1277 = scmp.lt.s32.totalorder %s21, 1
        %s1278 = scalar_select %p1277, %s21, 1
        %s1279 = smul.addr %s1278, 15
        %s1280 = smul.addr %s1279, 8
        %s1281 = scalar_lea.vmem %s4, %s1280
      $region56: #{rocstar_forward.3} parent=51 // pred_fallthru
        _
    $region52: #{rocstar_forward.3} parent=5 // pred_fallthru
      _
  $region6: #{rocstar_forward.3} parent=0 // loop_footer
    %s14 = sadd.s32 1, %s10
  $region7: #{rocstar_forward.3} parent=0 // loop_footer_branch
    %9 = sbr.rel target = $region3
  $region8: #{rocstar_forward.3} parent=0 // loop_exit
    _

</llo_original>
